<compile_context>
chip_gen: v7x
topology: tpu7x:2x2x1
jax: 0.10.0
libtpu: 0.0.40
codegen_flags: <defaults>
</compile_context>

<pallas_src>
import jax
import jax.numpy as jnp
from jax.experimental import pallas as pl
from jax.experimental.pallas import tpu as pltpu


D_IN, D_H1, D_H2, D_OUT = 4, 128, 64, 2

_LANE = 128           # batch tile must be a multiple of the 128-lane width
_MAX_BLOCK_B = 32768  # cap on the default batch tile (columns)
_SPLIT_THRESHOLD = 4096  # batches >= this get >= 2 grid steps (v7x 2-TC split)

# Rough per-batch-column VMEM footprint in the transposed layout (bytes):
#   x tile f32 (8-sublane padded, double buffered)  ~  64
#   x bf16 cast (16-sublane padded)                 ~  32
#   h1 f32 (128 rows) + bf16 cast                   ~ 768
#   h2 f32 ( 64 rows) + bf16 cast                   ~ 384
#   out tile (8-sublane padded, double buffered)    ~  96
_BYTES_PER_COL = 1344


def mlp_kernel(xT_ref, w1_ref, b1_ref, w2_ref, b2_ref, w3_ref, b3_ref, oT_ref):
    """Fused fc1+ReLU -> fc2+ReLU -> fc3 on one (4, bb) transposed batch tile.

    Matmul operands are bf16 (native MXU rate); accumulation, bias add and
    ReLU are f32 (safe on v5e, which has no bf16 VPU/EUP).
    """
    # In-kernel cast: avoids a separate host-side cast pass over x in HBM.
    xT = xT_ref[...].astype(w1_ref.dtype)                          # (4, bb)
    # fc1: (128, 4) @ (4, bb) -> (128, bb)
    h1 = jnp.dot(w1_ref[...], xT, preferred_element_type=jnp.float32)
    h1 = jnp.maximum(h1 + b1_ref[...], 0.0)
    # fc2: (64, 128) @ (128, bb) -> (64, bb)
    h2 = jnp.dot(w2_ref[...], h1.astype(w2_ref.dtype),
                 preferred_element_type=jnp.float32)
    h2 = jnp.maximum(h2 + b2_ref[...], 0.0)
    # fc3: (2, 64) @ (64, bb) -> (2, bb), lane-dense output.
    out = jnp.dot(w3_ref[...], h2.astype(w3_ref.dtype),
                  preferred_element_type=jnp.float32)
    oT_ref[...] = (out + b3_ref[...]).astype(oT_ref.dtype)


def _round_up(x, m):
    return ((x + m - 1) // m) * m


def _default_vmem_limit():
    """Per-generation scoped-VMEM limit (headroom below physical VMEM)."""
    try:
        kind = jax.devices()[0].device_kind.lower()
    except Exception:  # pragma: no cover - defensive
        kind = ""
    if "v7" in kind or "7x" in kind:
        return 48 * 1024 * 1024     # v7x: 64 MiB physical per TC
    if "v2" in kind or "v3" in kind:
        return 12 * 1024 * 1024     # old gens: 16 MiB physical
    if any(g in kind for g in ("v4", "v5", "v6")):
        return 96 * 1024 * 1024     # 128 MiB physical
    return 48 * 1024 * 1024         # conservative fallback


def _pick_block_b(batch, requested, vmem_limit_bytes):
    """Batch tile (in lane columns): multiple of 128, sized to the VMEM
    budget, big enough to amortize per-grid-step overhead, and split into
    >=2 steps for large batches (v7x megacore)."""
    full = _round_up(max(batch, 1), _LANE)
    if requested is not None:
        return max(_LANE, (min(requested, full) // _LANE) * _LANE)
    tile_budget = int(vmem_limit_bytes * 0.6)   # leave compiler headroom
    bb = max(_LANE, min(tile_budget // _BYTES_PER_COL, _MAX_BLOCK_B))
    bb = (bb // _LANE) * _LANE
    if full <= bb:
        if full >= _SPLIT_THRESHOLD:
            # whole batch would fit in one tile: split in two for the v7x
            # second core / pipelining.
            bb = _round_up(pl.cdiv(full, 2), _LANE)
        else:
            bb = full
    return bb


def simple_nn_forward(x, params, *, block_b=None, out_dtype=jnp.float32,
                      compute_dtype=jnp.bfloat16, vmem_limit_bytes=None):
    """x: (B, 4) float32. params: PyTorch-layout weights w{1,2,3}: (out, in),
    biases b{1,2,3}: (out,). Returns (B, 2) in `out_dtype`."""
    B, d_in = x.shape
    assert d_in == D_IN

    if vmem_limit_bytes is None:
        vmem_limit_bytes = _default_vmem_limit()
    bb = _pick_block_b(B, block_b, vmem_limit_bytes)
    steps = pl.cdiv(B, bb)
    if block_b is None and steps >= 2 and steps % 2 == 1:
        # Prefer an even step count (balanced v7x 2-TC split) by shrinking the
        # tile rather than adding a whole padded step of dead work.
        alt_bb = _round_up(pl.cdiv(_round_up(B, _LANE), steps + 1), _LANE)
        if pl.cdiv(B, alt_bb) % 2 == 0:
            bb = alt_bb
            steps = pl.cdiv(B, bb)
    b_padded = steps * bb

    # Single fused pad+transpose pass: (B, 4) f32 -> (4, b_padded) f32.
    # bf16 cast happens inside the kernel.
    xT = jnp.pad(x, ((0, b_padded - B), (0, 0))).T

    # bf16 MXU operands for the weights; biases stay f32 (added post-accum).
    w1c = params["w1"].astype(compute_dtype)                 # (128, 4)
    w2c = params["w2"].astype(compute_dtype)                 # (64, 128)
    w3c = params["w3"].astype(compute_dtype)                 # (2, 64)
    b1f = params["b1"].astype(jnp.float32).reshape(-1, 1)    # (128, 1)
    b2f = params["b2"].astype(jnp.float32).reshape(-1, 1)    # (64, 1)
    b3f = params["b3"].astype(jnp.float32).reshape(-1, 1)    # (2, 1)

    outT = pl.pallas_call(
        mlp_kernel,
        out_shape=jax.ShapeDtypeStruct((D_OUT, b_padded), out_dtype),
        grid_spec=pltpu.PrefetchScalarGridSpec(
            num_scalar_prefetch=0,
            grid=(steps,),
            in_specs=[
                # x^T tile: lane-dense, pipelined along the batch grid axis.
                pl.BlockSpec((D_IN, bb), lambda i: (0, i)),
                # Weights/biases: constant index maps -> resident in VMEM.
                pl.BlockSpec(w1c.shape, lambda i: (0, 0)),
                pl.BlockSpec(b1f.shape, lambda i: (0, 0)),
                pl.BlockSpec(w2c.shape, lambda i: (0, 0)),
                pl.BlockSpec(b2f.shape, lambda i: (0, 0)),
                pl.BlockSpec(w3c.shape, lambda i: (0, 0)),
                pl.BlockSpec(b3f.shape, lambda i: (0, 0)),
            ],
            out_specs=pl.BlockSpec((D_OUT, bb), lambda i: (0, i)),
        ),
        compiler_params=pltpu.CompilerParams(
            # Batch axis is embarrassingly parallel (megacore split on v7x;
            # no-op on single-TC v5e/v6e).
            dimension_semantics=("parallel",),
            vmem_limit_bytes=vmem_limit_bytes,
        ),
    )(xT, w1c, b1f, w2c, b2f, w3c, b3f)

    # Back to PyTorch layout (B, 2): one tiny fused transpose+slice.
    return outT.T[:B]


def init_params(key):
    """PyTorch nn.Linear layout/init: W (out, in), b (out,), U(+-1/sqrt(fan_in))."""
    dims = [(D_IN, D_H1), (D_H1, D_H2), (D_H2, D_OUT)]
    params = {}
    keys = jax.random.split(key, 2 * len(dims))
    for idx, (fan_in, fan_out) in enumerate(dims):
        bound = 1.0 / jnp.sqrt(fan_in)
        params[f"w{idx + 1}"] = jax.random.uniform(
            keys[2 * idx], (fan_out, fan_in), jnp.float32, -bound, bound)
        params[f"b{idx + 1}"] = jax.random.uniform(
            keys[2 * idx + 1], (fan_out,), jnp.float32, -bound, bound)
    return params


def reference_forward(x, params):
    """Pure f32 reference (PyTorch semantics: y = x @ W^T + b)."""
    h = jnp.maximum(x @ params["w1"].T + params["b1"], 0.0)
    h = jnp.maximum(h @ params["w2"].T + params["b2"], 0.0)
    return h @ params["w3"].T + params["b3"]


def emulated_reference(x, params, compute_dtype=jnp.bfloat16):
    """f32 math with bf16-rounded matmul operands == what the kernel computes."""
    def r(a):
        return a.astype(compute_dtype).astype(jnp.float32)
    h = jnp.maximum(jnp.dot(r(x), r(params["w1"]).T) + params["b1"], 0.0)
    h = jnp.maximum(jnp.dot(r(h), r(params["w2"]).T) + params["b2"], 0.0)
    return jnp.dot(r(h), r(params["w3"]).T) + params["b3"]


if __name__ == "__main__":
    key = jax.random.PRNGKey(0)
    k_param, k_x1, k_x2, k_x3 = jax.random.split(key, 4)
    params = init_params(k_param)

    # Tiny batch: single 128-column tile (padded 8 -> 128).
    x_small = jax.random.normal(k_x1, (8, D_IN), jnp.float32)
    out_small = jax.block_until_ready(simple_nn_forward(x_small, params))

    # Non-multiple-of-128 batch: exercises padding + output slice-back.
    x_pad = jax.random.normal(k_x2, (100, D_IN), jnp.float32)
    out_pad = jax.block_until_ready(simple_nn_forward(x_pad, params))

    # Forced small tile -> multi-step grid (pipelining path).
    x_grid = jax.random.normal(k_x3, (300, D_IN), jnp.float32)
    out_grid = jax.block_until_ready(
        simple_nn_forward(x_grid, params, block_b=128))

    for x, out in ((x_small, out_small), (x_pad, out_pad), (x_grid, out_grid)):
        assert out.shape == (x.shape[0], D_OUT)
        ref_emu = emulated_reference(x, params)   # exact kernel math
        ref_f32 = reference_forward(x, params)    # pure-f32 sanity check
        assert jnp.allclose(out, ref_emu, atol=2e-3, rtol=2e-3), (
            float(jnp.max(jnp.abs(out - ref_emu))))
        assert jnp.allclose(out, ref_f32, atol=5e-2, rtol=5e-2), (
            float(jnp.max(jnp.abs(out - ref_f32))))

    # Optional bf16 output path (halves output write bytes).
    out_bf16 = jax.block_until_ready(
        simple_nn_forward(x_pad, params, out_dtype=jnp.bfloat16))
    assert out_bf16.dtype == jnp.bfloat16 and out_bf16.shape == (100, D_OUT)
    assert jnp.allclose(out_bf16.astype(jnp.float32),
                        emulated_reference(x_pad, params),
                        atol=3e-2, rtol=3e-2)

    print("KERNEL_OK")
</pallas_src>

<mosaic_0001>
module attributes {stable_mosaic.version = 11 : i64} {
  func.func @mlp_kernel(%arg0: i32, %arg1: memref<4x128xf32, #tpu.memory_space<vmem>>, %arg2: memref<128x4xbf16, #tpu.memory_space<vmem>>, %arg3: memref<128x1xf32, #tpu.memory_space<vmem>>, %arg4: memref<64x128xbf16, #tpu.memory_space<vmem>>, %arg5: memref<64x1xf32, #tpu.memory_space<vmem>>, %arg6: memref<2x64xbf16, #tpu.memory_space<vmem>>, %arg7: memref<2x1xf32, #tpu.memory_space<vmem>>, %arg8: memref<2x128xf32, #tpu.memory_space<vmem>>) attributes {dimension_semantics = [#tpu.dimension_semantics<parallel>], iteration_bounds = array<i64: 1>, scalar_prefetch = 0 : i64, scratch_operands = 0 : i64, tpu.core_type = #tpu.core_type<tc>, window_params = [{transform_indices = @transform_0, window_bounds = array<i64: 4, 128>}, {pipeline_mode = #tpu.pipeline_mode<synchronous>, transform_indices = @transform_1, window_bounds = array<i64: 128, 4>}, {pipeline_mode = #tpu.pipeline_mode<synchronous>, transform_indices = @transform_2, window_bounds = array<i64: 128, 1>}, {pipeline_mode = #tpu.pipeline_mode<synchronous>, transform_indices = @transform_3, window_bounds = array<i64: 64, 128>}, {pipeline_mode = #tpu.pipeline_mode<synchronous>, transform_indices = @transform_4, window_bounds = array<i64: 64, 1>}, {pipeline_mode = #tpu.pipeline_mode<synchronous>, transform_indices = @transform_5, window_bounds = array<i64: 2, 64>}, {pipeline_mode = #tpu.pipeline_mode<synchronous>, transform_indices = @transform_6, window_bounds = array<i64: 2, 1>}, {transform_indices = @transform_7, window_bounds = array<i64: 2, 128>}]} {
    %c0 = arith.constant 0 : index
    %c0_0 = arith.constant 0 : index
    %0 = vector.load %arg1[%c0, %c0_0] : memref<4x128xf32, #tpu.memory_space<vmem>>, vector<4x128xf32>
    %1 = arith.truncf %0 : vector<4x128xf32> to vector<4x128xbf16>
    %c0_1 = arith.constant 0 : index
    %c0_2 = arith.constant 0 : index
    %2 = vector.load %arg2[%c0_1, %c0_2] : memref<128x4xbf16, #tpu.memory_space<vmem>>, vector<128x4xbf16>
    %cst = arith.constant dense<0.000000e+00> : vector<128x128xf32>
    %3 = tpu.matmul %2, %1, %cst {dimension_numbers = #tpu.dot_dimension_numbers<[1], [0], [0], [1], [0, 0, 1, 1], [], []>} : vector<128x4xbf16>, vector<4x128xbf16>, vector<128x128xf32> -> vector<128x128xf32>
    %c0_3 = arith.constant 0 : index
    %c0_4 = arith.constant 0 : index
    %4 = vector.load %arg3[%c0_3, %c0_4] : memref<128x1xf32, #tpu.memory_space<vmem>>, vector<128x1xf32>
    %5 = vector.broadcast %4 : vector<128x1xf32> to vector<128x128xf32>
    %6 = arith.addf %3, %5 : vector<128x128xf32>
    %cst_5 = arith.constant 0.000000e+00 : f32
    %7 = vector.broadcast %cst_5 : f32 to vector<128x128xf32>
    %8 = arith.maximumf %6, %7 : vector<128x128xf32>
    %c0_6 = arith.constant 0 : index
    %c0_7 = arith.constant 0 : index
    %9 = vector.load %arg4[%c0_6, %c0_7] : memref<64x128xbf16, #tpu.memory_space<vmem>>, vector<64x128xbf16>
    %10 = arith.truncf %8 : vector<128x128xf32> to vector<128x128xbf16>
    %cst_8 = arith.constant dense<0.000000e+00> : vector<64x128xf32>
    %11 = tpu.matmul %9, %10, %cst_8 {dimension_numbers = #tpu.dot_dimension_numbers<[1], [0], [0], [1], [0, 0, 1, 1], [], []>} : vector<64x128xbf16>, vector<128x128xbf16>, vector<64x128xf32> -> vector<64x128xf32>
    %c0_9 = arith.constant 0 : index
    %c0_10 = arith.constant 0 : index
    %12 = vector.load %arg5[%c0_9, %c0_10] : memref<64x1xf32, #tpu.memory_space<vmem>>, vector<64x1xf32>
    %13 = vector.broadcast %12 : vector<64x1xf32> to vector<64x128xf32>
    %14 = arith.addf %11, %13 : vector<64x128xf32>
    %cst_11 = arith.constant 0.000000e+00 : f32
    %15 = vector.broadcast %cst_11 : f32 to vector<64x128xf32>
    %16 = arith.maximumf %14, %15 : vector<64x128xf32>
    %c0_12 = arith.constant 0 : index
    %c0_13 = arith.constant 0 : index
    %17 = vector.load %arg6[%c0_12, %c0_13] : memref<2x64xbf16, #tpu.memory_space<vmem>>, vector<2x64xbf16>
    %18 = arith.truncf %16 : vector<64x128xf32> to vector<64x128xbf16>
    %cst_14 = arith.constant dense<0.000000e+00> : vector<2x128xf32>
    %19 = tpu.matmul %17, %18, %cst_14 {dimension_numbers = #tpu.dot_dimension_numbers<[1], [0], [0], [1], [0, 0, 1, 1], [], []>} : vector<2x64xbf16>, vector<64x128xbf16>, vector<2x128xf32> -> vector<2x128xf32>
    %c0_15 = arith.constant 0 : index
    %c0_16 = arith.constant 0 : index
    %20 = vector.load %arg7[%c0_15, %c0_16] : memref<2x1xf32, #tpu.memory_space<vmem>>, vector<2x1xf32>
    %21 = vector.broadcast %20 : vector<2x1xf32> to vector<2x128xf32>
    %22 = arith.addf %19, %21 : vector<2x128xf32>
    %c0_17 = arith.constant 0 : index
    %c0_18 = arith.constant 0 : index
    %23 = vector.load %arg8[%c0_17, %c0_18] : memref<2x128xf32, #tpu.memory_space<vmem>>, vector<2x128xf32>
    tpu.vector_store %arg8[%c0_17, %c0_18], %22 {strides = array<i32>} : memref<2x128xf32, #tpu.memory_space<vmem>>, vector<2x128xf32>,
    return
  }
  func.func @transform_0(%arg0: i32) -> (i32, i32) {
    %c0_i32 = arith.constant 0 : i32
    %c0_i32_0 = arith.constant 0 : i32
    return %c0_i32, %arg0 : i32, i32
  }
  func.func @transform_1(%arg0: i32) -> (i32, i32) {
    %c0_i32 = arith.constant 0 : i32
    %c0_i32_0 = arith.constant 0 : i32
    %c0_i32_1 = arith.constant 0 : i32
    return %c0_i32, %c0_i32_0 : i32, i32
  }
  func.func @transform_2(%arg0: i32) -> (i32, i32) {
    %c0_i32 = arith.constant 0 : i32
    %c0_i32_0 = arith.constant 0 : i32
    %c0_i32_1 = arith.constant 0 : i32
    return %c0_i32, %c0_i32_0 : i32, i32
  }
  func.func @transform_3(%arg0: i32) -> (i32, i32) {
    %c0_i32 = arith.constant 0 : i32
    %c0_i32_0 = arith.constant 0 : i32
    %c0_i32_1 = arith.constant 0 : i32
    return %c0_i32, %c0_i32_0 : i32, i32
  }
  func.func @transform_4(%arg0: i32) -> (i32, i32) {
    %c0_i32 = arith.constant 0 : i32
    %c0_i32_0 = arith.constant 0 : i32
    %c0_i32_1 = arith.constant 0 : i32
    return %c0_i32, %c0_i32_0 : i32, i32
  }
  func.func @transform_5(%arg0: i32) -> (i32, i32) {
    %c0_i32 = arith.constant 0 : i32
    %c0_i32_0 = arith.constant 0 : i32
    %c0_i32_1 = arith.constant 0 : i32
    return %c0_i32, %c0_i32_0 : i32, i32
  }
  func.func @transform_6(%arg0: i32) -> (i32, i32) {
    %c0_i32 = arith.constant 0 : i32
    %c0_i32_0 = arith.constant 0 : i32
    %c0_i32_1 = arith.constant 0 : i32
    return %c0_i32, %c0_i32_0 : i32, i32
  }
  func.func @transform_7(%arg0: i32) -> (i32, i32) {
    %c0_i32 = arith.constant 0 : i32
    %c0_i32_0 = arith.constant 0 : i32
    return %c0_i32, %arg0 : i32, i32
  }
}

</mosaic_0001>

<llo_original>
// kernel: tpu_custom_call.1
$region0: #{tpu_custom_call.1}
  #allocation0 [shape = 'u32[]', space=smem, size = 0x4, offset = 0x4, fixed_abs, tag = 'smem constant byte address 0x4 - core index']
  #allocation1 [shape = 'u32[144,128]{1,0:T(1,128)}', space=vmem, size = 0x12000, scoped, tag = 'internal scratch']
  %s0 = inlined_call_operand.vmem [shape: f32[4,128], index: 0, kind: input, shape index: {}]
  %s1 = inlined_call_operand.vmem [shape: bf16[128,4], index: 1, kind: input, shape index: {}]
  %s2 = inlined_call_operand.vmem [shape: f32[128,1], index: 2, kind: input, shape index: {}]
  %s3 = inlined_call_operand.vmem [shape: bf16[64,128], index: 3, kind: input, shape index: {}]
  %s4 = inlined_call_operand.vmem [shape: f32[64,1], index: 4, kind: input, shape index: {}]
  %s5 = inlined_call_operand.vmem [shape: bf16[2,64], index: 5, kind: input, shape index: {}]
  %s6 = inlined_call_operand.vmem [shape: f32[2,1], index: 6, kind: input, shape index: {}]
  %s7 = inlined_call_operand.hbm [shape: f32[2,128], index: 7, kind: output, shape index: {}]
  %s8 = sld [smem:[#allocation0]]
  $region38: #{tpu_custom_call.1} parent=0
    _
  %s10 = ssub.s32 1, %s8
  %s11 = scalar_select 0, %s10, %s8
  $region1: #{tpu_custom_call.1} parent=0
    #allocation2 [shape = 'u8[1024]{0}', space=vmem, size = 0x400, scoped, tag = 'output window, operand 0, single buffered']
    #allocation3 [shape = 's32[1]{0}', space=sflag, size = 0x4, scoped, tag = 'scoped memory for tpu_custom_call.1']
    %12 = vsyncpa [#allocation3], 0
    // Predicated region
    $region2: #{tpu_custom_call.1} parent=1 // pred_check
      _
    $region3: #{tpu_custom_call.1} parent=1 // pred_check_branch
      %14 = sbr.rel (0) target = $region5
    $region4: #{tpu_custom_call.1} parent=1 // pred_region
      _
    $region5: #{tpu_custom_call.1} parent=1 // pred_fallthru
      _
    // Predicated region
    $region6: #{tpu_custom_call.1} parent=1 // pred_check
      _
    $region7: #{tpu_custom_call.1} parent=1 // pred_check_branch
      %16 = sbr.rel (0) target = $region9
    $region8: #{tpu_custom_call.1} parent=1 // pred_region
      _
    $region9: #{tpu_custom_call.1} parent=1 // pred_fallthru
      _
    // Predicated region
    $region10: #{tpu_custom_call.1} parent=1 // pred_check
      _
    $region11: #{tpu_custom_call.1} parent=1 // pred_check_branch
      %18 = sbr.rel (0) target = $region13
    $region12: #{tpu_custom_call.1} parent=1 // pred_region
      _
    $region13: #{tpu_custom_call.1} parent=1 // pred_fallthru
      _
    // Predicated region
    $region14: #{tpu_custom_call.1} parent=1 // pred_check
      _
    $region15: #{tpu_custom_call.1} parent=1 // pred_check_branch
      %20 = sbr.rel (0) target = $region17
    $region16: #{tpu_custom_call.1} parent=1 // pred_region
      _
    $region17: #{tpu_custom_call.1} parent=1 // pred_fallthru
      _
    // Predicated region
    $region18: #{tpu_custom_call.1} parent=1 // pred_check
      _
    $region19: #{tpu_custom_call.1} parent=1 // pred_check_branch
      %22 = sbr.rel (0) target = $region21
    $region20: #{tpu_custom_call.1} parent=1 // pred_region
      _
    $region21: #{tpu_custom_call.1} parent=1 // pred_fallthru
      _
    // Predicated region
    $region22: #{tpu_custom_call.1} parent=1 // pred_check
      _
    $region23: #{tpu_custom_call.1} parent=1 // pred_check_branch
      %24 = sbr.rel (0) target = $region25
    $region24: #{tpu_custom_call.1} parent=1 // pred_region
      _
    $region25: #{tpu_custom_call.1} parent=1 // pred_fallthru
      _
    // Predicated region
    $region26: #{tpu_custom_call.1} parent=1 // pred_check
      _
    $region27: #{tpu_custom_call.1} parent=1 // pred_check_branch
      %26 = sbr.rel (0) target = $region29
    $region28: #{tpu_custom_call.1} parent=1 // pred_region
      _
    $region29: #{tpu_custom_call.1} parent=1 // pred_fallthru
      _
    %v28 = vld [vmem:[%s0] sm:$0xf]
    %v29 = vpack.c.bf16 %v28, %v28
    %v30 = vld [vmem:[%s1] sm:$0xf]
    %v31 = vld [vmem:[%s1 + $0x4] sm:$0xf]
    %v32 = vld [vmem:[%s1 + $0x8] sm:$0xf]
    %v33 = vld [vmem:[%s1 + $0xc] sm:$0xf]
    %v34 = vld [vmem:[%s1 + $0x10] sm:$0xf]
    %v35 = vld [vmem:[%s1 + $0x14] sm:$0xf]
    %v36 = vld [vmem:[%s1 + $0x18] sm:$0xf]
    %v37 = vld [vmem:[%s1 + $0x1c] sm:$0xf]
    %v38 = vld [vmem:[%s1 + $0x20] sm:$0xf]
    %v39 = vld [vmem:[%s1 + $0x24] sm:$0xf]
    %v40 = vld [vmem:[%s1 + $0x28] sm:$0xf]
    %v41 = vld [vmem:[%s1 + $0x2c] sm:$0xf]
    %v42 = vld [vmem:[%s1 + $0x30] sm:$0xf]
    %v43 = vld [vmem:[%s1 + $0x34] sm:$0xf]
    %v44 = vld [vmem:[%s1 + $0x38] sm:$0xf]
    %v45 = vld [vmem:[%s1 + $0x3c] sm:$0xf]
    %v46 = vld [vmem:[%s2] sm:$0xff]
    %v47 = vld [vmem:[%s2 + $0x8] sm:$0xff]
    %v48 = vld [vmem:[%s2 + $0x10] sm:$0xff]
    %v49 = vld [vmem:[%s2 + $0x18] sm:$0xff]
    %v50 = vld [vmem:[%s2 + $0x20] sm:$0xff]
    %v51 = vld [vmem:[%s2 + $0x28] sm:$0xff]
    %v52 = vld [vmem:[%s2 + $0x30] sm:$0xff]
    %v53 = vld [vmem:[%s2 + $0x38] sm:$0xff]
    %v54 = vld [vmem:[%s2 + $0x40] sm:$0xff]
    %v55 = vld [vmem:[%s2 + $0x48] sm:$0xff]
    %v56 = vld [vmem:[%s2 + $0x50] sm:$0xff]
    %v57 = vld [vmem:[%s2 + $0x58] sm:$0xff]
    %v58 = vld [vmem:[%s2 + $0x60] sm:$0xff]
    %v59 = vld [vmem:[%s2 + $0x68] sm:$0xff]
    %v60 = vld [vmem:[%s2 + $0x70] sm:$0xff]
    %v61 = vld [vmem:[%s2 + $0x78] sm:$0xff]
    %63 = vset.pattern.permute.xlu0 0
    %64 = vperm.xlu0 %63, %v46
    %v65 = vpop.permute.xlu0 %64
    %68 = vset.pattern.permute.xlu0 0
    %69 = vperm.xlu0 %68, %v47
    %v70 = vpop.permute.xlu0 %69
    %73 = vset.pattern.permute.xlu0 0
    %74 = vperm.xlu0 %73, %v48
    %v75 = vpop.permute.xlu0 %74
    %78 = vset.pattern.permute.xlu0 0
    %79 = vperm.xlu0 %78, %v49
    %v80 = vpop.permute.xlu0 %79
    %83 = vset.pattern.permute.xlu0 0
    %84 = vperm.xlu0 %83, %v50
    %v85 = vpop.permute.xlu0 %84
    %88 = vset.pattern.permute.xlu0 0
    %89 = vperm.xlu0 %88, %v51
    %v90 = vpop.permute.xlu0 %89
    %93 = vset.pattern.permute.xlu0 0
    %94 = vperm.xlu0 %93, %v52
    %v95 = vpop.permute.xlu0 %94
    %98 = vset.pattern.permute.xlu0 0
    %99 = vperm.xlu0 %98, %v53
    %v100 = vpop.permute.xlu0 %99
    %103 = vset.pattern.permute.xlu0 0
    %104 = vperm.xlu0 %103, %v54
    %v105 = vpop.permute.xlu0 %104
    %108 = vset.pattern.permute.xlu0 0
    %109 = vperm.xlu0 %108, %v55
    %v110 = vpop.permute.xlu0 %109
    %113 = vset.pattern.permute.xlu0 0
    %114 = vperm.xlu0 %113, %v56
    %v115 = vpop.permute.xlu0 %114
    %118 = vset.pattern.permute.xlu0 0
    %119 = vperm.xlu0 %118, %v57
    %v120 = vpop.permute.xlu0 %119
    %123 = vset.pattern.permute.xlu0 0
    %124 = vperm.xlu0 %123, %v58
    %v125 = vpop.permute.xlu0 %124
    %128 = vset.pattern.permute.xlu0 0
    %129 = vperm.xlu0 %128, %v59
    %v130 = vpop.permute.xlu0 %129
    %133 = vset.pattern.permute.xlu0 0
    %134 = vperm.xlu0 %133, %v60
    %v135 = vpop.permute.xlu0 %134
    %138 = vset.pattern.permute.xlu0 0
    %139 = vperm.xlu0 %138, %v61
    %v140 = vpop.permute.xlu0 %139
    %v158 = vunpack.c.l.b16 %v30
    %v159 = vunpack.c.l.b16 %v31
    %v160 = vunpack.c.l.b16 %v32
    %v161 = vunpack.c.l.b16 %v33
    %v162 = vunpack.c.l.b16 %v34
    %v163 = vunpack.c.l.b16 %v35
    %v164 = vunpack.c.l.b16 %v36
    %v165 = vunpack.c.l.b16 %v37
    %v166 = vunpack.c.l.b16 %v38
    %v167 = vunpack.c.l.b16 %v39
    %v168 = vunpack.c.l.b16 %v40
    %v169 = vunpack.c.l.b16 %v41
    %v170 = vunpack.c.l.b16 %v42
    %v171 = vunpack.c.l.b16 %v43
    %v172 = vunpack.c.l.b16 %v44
    %v173 = vunpack.c.l.b16 %v45
    %v174 = vpack.c.b16 %v159, %v158
    %v175 = vpack.c.b16 %v161, %v160
    %v176 = vpack.c.b16 %v163, %v162
    %v177 = vpack.c.b16 %v165, %v164
    %v178 = vpack.c.b16 %v167, %v166
    %v179 = vpack.c.b16 %v169, %v168
    %v180 = vpack.c.b16 %v171, %v170
    %v181 = vpack.c.b16 %v173, %v172
    %vm182 = vcmask 31744
    %v184 = vsel %vm182, %v174, 0
    %v187 = vsel %vm182, %v175, 0
    %v190 = vsel %vm182, %v176, 0
    %v193 = vsel %vm182, %v177, 0
    %v196 = vsel %vm182, %v178, 0
    %v199 = vsel %vm182, %v179, 0
    %v202 = vsel %vm182, %v180, 0
    %v205 = vsel %vm182, %v181, 0
    %vm207 = vcmask 1041408
    %v209 = vsel %vm207, %v29, 0
    %211 = vmatprep.subr.bf16.mxu0 0
    %212 = vmatpush1.bf16.msra.mxu0 %v209
    %213 = vmatprep.subr.bf16.mxu0 0
    %214 = vmatpush1.bf16.msra.mxu0 0
    %215 = vmatprep.subr.bf16.mxu0 0
    %216 = vmatpush1.bf16.msra.mxu0 0
    %217 = vmatprep.subr.bf16.mxu0 0
    %218 = vmatpush1.bf16.msra.mxu0 0
    %219 = vmatprep.subr.bf16.mxu0 0
    %220 = vmatpush1.bf16.msra.mxu0 0
    %221 = vmatprep.subr.bf16.mxu0 0
    %222 = vmatpush1.bf16.msra.mxu0 0
    %223 = vmatprep.subr.bf16.mxu0 0
    %224 = vmatpush1.bf16.msra.mxu0 0
    %225 = vmatprep.subr.bf16.mxu0 0
    %226 = vmatpush1.bf16.msra.mxu0 0
    %227 = vmatprep.subr.bf16.mxu0 0
    %228 = vmatpush1.bf16.msra.mxu0 0
    %229 = vmatprep.subr.bf16.mxu0 0
    %230 = vmatpush1.bf16.msra.mxu0 0
    %231 = vmatprep.subr.bf16.mxu0 0
    %232 = vmatpush1.bf16.msra.mxu0 0
    %233 = vmatprep.subr.bf16.mxu0 0
    %234 = vmatpush1.bf16.msra.mxu0 0
    %235 = vmatprep.subr.bf16.mxu0 0
    %236 = vmatpush1.bf16.msra.mxu0 0
    %237 = vmatprep.subr.bf16.mxu0 0
    %238 = vmatpush1.bf16.msra.mxu0 0
    %239 = vmatprep.subr.bf16.mxu0 0
    %240 = vmatpush1.bf16.msra.mxu0 0
    %241 = vmatprep.subr.bf16.mxu0 0
    %242 = vmatpush1.bf16.msra.mxu0 0
    %243 = vmatprep.mubr.bf16.mxu0 0
    %244 = vmatmul.mubr.bf16.gmra.mrb[0].mxu0 %v184
    %v245 = vpop.f32.mrb[0].mxu0
    %v246 = vadd.f32 %v65, %v245
    %v247 = vpop.f32.mrb[0].mxu0
    %v248 = vpop.f32.mrb[0].mxu0
    %v249 = vadd.f32 %v70, %v248
    %v250 = vpop.f32.mrb[0].mxu0
    %251 = vmatprep.mubr.bf16.mxu0 0
    %252 = vmatmul.mubr.bf16.gmra.mrb[0].mxu0 %v187
    %v253 = vpop.f32.mrb[0].mxu0
    %v254 = vadd.f32 %v75, %v253
    %v255 = vpop.f32.mrb[0].mxu0
    %v256 = vpop.f32.mrb[0].mxu0
    %v257 = vadd.f32 %v80, %v256
    %v258 = vpop.f32.mrb[0].mxu0
    %259 = vmatprep.mubr.bf16.mxu0 0
    %260 = vmatmul.mubr.bf16.gmra.mrb[0].mxu0 %v190
    %v261 = vpop.f32.mrb[0].mxu0
    %v262 = vadd.f32 %v85, %v261
    %v263 = vpop.f32.mrb[0].mxu0
    %v264 = vpop.f32.mrb[0].mxu0
    %v265 = vadd.f32 %v90, %v264
    %v266 = vpop.f32.mrb[0].mxu0
    %267 = vmatprep.mubr.bf16.mxu0 0
    %268 = vmatmul.mubr.bf16.gmra.mrb[0].mxu0 %v193
    %v269 = vpop.f32.mrb[0].mxu0
    %v270 = vadd.f32 %v95, %v269
    %v271 = vpop.f32.mrb[0].mxu0
    %v272 = vpop.f32.mrb[0].mxu0
    %v273 = vadd.f32 %v100, %v272
    %v274 = vpop.f32.mrb[0].mxu0
    %275 = vmatprep.mubr.bf16.mxu0 0
    %276 = vmatmul.mubr.bf16.gmra.mrb[0].mxu0 %v196
    %v277 = vpop.f32.mrb[0].mxu0
    %v278 = vadd.f32 %v105, %v277
    %v279 = vpop.f32.mrb[0].mxu0
    %v280 = vpop.f32.mrb[0].mxu0
    %v281 = vadd.f32 %v110, %v280
    %v282 = vpop.f32.mrb[0].mxu0
    %283 = vmatprep.mubr.bf16.mxu0 0
    %284 = vmatmul.mubr.bf16.gmra.mrb[0].mxu0 %v199
    %v285 = vpop.f32.mrb[0].mxu0
    %v286 = vadd.f32 %v115, %v285
    %v287 = vpop.f32.mrb[0].mxu0
    %v288 = vpop.f32.mrb[0].mxu0
    %v289 = vadd.f32 %v120, %v288
    %v290 = vpop.f32.mrb[0].mxu0
    %291 = vmatprep.mubr.bf16.mxu0 0
    %292 = vmatmul.mubr.bf16.gmra.mrb[0].mxu0 %v202
    %v293 = vpop.f32.mrb[0].mxu0
    %v294 = vadd.f32 %v125, %v293
    %v295 = vpop.f32.mrb[0].mxu0
    %v296 = vpop.f32.mrb[0].mxu0
    %v297 = vadd.f32 %v130, %v296
    %v298 = vpop.f32.mrb[0].mxu0
    %299 = vmatprep.mubr.bf16.mxu0 0
    %300 = vmatmul.mubr.bf16.gmra.mrb[0].mxu0 %v205
    %v301 = vpop.f32.mrb[0].mxu0
    %v302 = vadd.f32 %v135, %v301
    %v303 = vpop.f32.mrb[0].mxu0
    %v304 = vpop.f32.mrb[0].mxu0
    %v305 = vadd.f32 %v140, %v304
    %v306 = vpop.f32.mrb[0].mxu0
    %307 = vdwg.mxu0
    %v308 = vmax.f32 %v246, 0.0
    %v309 = vmax.f32 %v249, 0.0
    %v310 = vmax.f32 %v254, 0.0
    %v311 = vmax.f32 %v257, 0.0
    %v312 = vmax.f32 %v262, 0.0
    %v313 = vmax.f32 %v265, 0.0
    %v314 = vmax.f32 %v270, 0.0
    %v315 = vmax.f32 %v273, 0.0
    %v316 = vmax.f32 %v278, 0.0
    %v317 = vmax.f32 %v281, 0.0
    %v318 = vmax.f32 %v286, 0.0
    %v319 = vmax.f32 %v289, 0.0
    %v320 = vmax.f32 %v294, 0.0
    %v321 = vmax.f32 %v297, 0.0
    %v322 = vmax.f32 %v302, 0.0
    %v323 = vmax.f32 %v305, 0.0
    %v324 = vld [vmem:[%s3] sm:$0xf]
    %v325 = vld [vmem:[%s3 + $0x4] sm:$0xf]
    %v326 = vld [vmem:[%s3 + $0x8] sm:$0xf]
    %v327 = vld [vmem:[%s3 + $0xc] sm:$0xf]
    %v328 = vld [vmem:[%s3 + $0x10] sm:$0xf]
    %v329 = vld [vmem:[%s3 + $0x14] sm:$0xf]
    %v330 = vld [vmem:[%s3 + $0x18] sm:$0xf]
    %v331 = vld [vmem:[%s3 + $0x1c] sm:$0xf]
    %v332 = vpack.c.bf16 %v309, %v308
    %v333 = vpack.c.bf16 %v311, %v310
    %v334 = vpack.c.bf16 %v313, %v312
    %v335 = vpack.c.bf16 %v315, %v314
    %v336 = vpack.c.bf16 %v317, %v316
    %v337 = vpack.c.bf16 %v319, %v318
    %v338 = vpack.c.bf16 %v321, %v320
    %v339 = vpack.c.bf16 %v323, %v322
    %v340 = vld [vmem:[%s4] sm:$0xff]
    %v341 = vld [vmem:[%s4 + $0x8] sm:$0xff]
    %v342 = vld [vmem:[%s4 + $0x10] sm:$0xff]
    %v343 = vld [vmem:[%s4 + $0x18] sm:$0xff]
    %v344 = vld [vmem:[%s4 + $0x20] sm:$0xff]
    %v345 = vld [vmem:[%s4 + $0x28] sm:$0xff]
    %v346 = vld [vmem:[%s4 + $0x30] sm:$0xff]
    %v347 = vld [vmem:[%s4 + $0x38] sm:$0xff]
    %349 = vset.pattern.permute.xlu0 0
    %350 = vperm.xlu0 %349, %v340
    %v351 = vpop.permute.xlu0 %350
    %354 = vset.pattern.permute.xlu0 0
    %355 = vperm.xlu0 %354, %v341
    %v356 = vpop.permute.xlu0 %355
    %359 = vset.pattern.permute.xlu0 0
    %360 = vperm.xlu0 %359, %v342
    %v361 = vpop.permute.xlu0 %360
    %364 = vset.pattern.permute.xlu0 0
    %365 = vperm.xlu0 %364, %v343
    %v366 = vpop.permute.xlu0 %365
    %369 = vset.pattern.permute.xlu0 0
    %370 = vperm.xlu0 %369, %v344
    %v371 = vpop.permute.xlu0 %370
    %374 = vset.pattern.permute.xlu0 0
    %375 = vperm.xlu0 %374, %v345
    %v376 = vpop.permute.xlu0 %375
    %379 = vset.pattern.permute.xlu0 0
    %380 = vperm.xlu0 %379, %v346
    %v381 = vpop.permute.xlu0 %380
    %384 = vset.pattern.permute.xlu0 0
    %385 = vperm.xlu0 %384, %v347
    %v386 = vpop.permute.xlu0 %385
    %v396 = vunpack.c.l.b16 %v324
    %v397 = vunpack.c.l.b16 %v325
    %v398 = vunpack.c.l.b16 %v326
    %v399 = vunpack.c.l.b16 %v327
    %v400 = vunpack.c.l.b16 %v328
    %v401 = vunpack.c.l.b16 %v329
    %v402 = vunpack.c.l.b16 %v330
    %v403 = vunpack.c.l.b16 %v331
    %v404 = vpack.c.b16 %v397, %v396
    %v405 = vpack.c.b16 %v399, %v398
    %v406 = vpack.c.b16 %v401, %v400
    %v407 = vpack.c.b16 %v403, %v402
    %412 = vmatprep.subr.bf16.mxu0 0
    %413 = vmatpush1.bf16.msra.mxu0 %v332
    %414 = vmatprep.subr.bf16.mxu0 0
    %415 = vmatpush1.bf16.msra.mxu0 %v333
    %416 = vmatprep.subr.bf16.mxu0 0
    %417 = vmatpush1.bf16.msra.mxu0 %v334
    %418 = vmatprep.subr.bf16.mxu0 0
    %419 = vmatpush1.bf16.msra.mxu0 %v335
    %420 = vmatprep.subr.bf16.mxu0 0
    %421 = vmatpush1.bf16.msra.mxu0 %v336
    %422 = vmatprep.subr.bf16.mxu0 0
    %423 = vmatpush1.bf16.msra.mxu0 %v337
    %424 = vmatprep.subr.bf16.mxu0 0
    %425 = vmatpush1.bf16.msra.mxu0 %v338
    %426 = vmatprep.subr.bf16.mxu0 0
    %427 = vmatpush1.bf16.msra.mxu0 %v339
    %428 = vmatprep.subr.bf16.mxu0 0
    %429 = vmatpush1.bf16.msra.mxu0 0
    %430 = vmatprep.subr.bf16.mxu0 0
    %431 = vmatpush1.bf16.msra.mxu0 0
    %432 = vmatprep.subr.bf16.mxu0 0
    %433 = vmatpush1.bf16.msra.mxu0 0
    %434 = vmatprep.subr.bf16.mxu0 0
    %435 = vmatpush1.bf16.msra.mxu0 0
    %436 = vmatprep.subr.bf16.mxu0 0
    %437 = vmatpush1.bf16.msra.mxu0 0
    %438 = vmatprep.subr.bf16.mxu0 0
    %439 = vmatpush1.bf16.msra.mxu0 0
    %440 = vmatprep.subr.bf16.mxu0 0
    %441 = vmatpush1.bf16.msra.mxu0 0
    %442 = vmatprep.subr.bf16.mxu0 0
    %443 = vmatpush1.bf16.msra.mxu0 0
    %444 = vmatprep.mubr.bf16.mxu0 0
    %445 = vmatmul.mubr.bf16.gmra.mrb[0].mxu0 %v404
    %v446 = vpop.f32.mrb[0].mxu0
    %v447 = vadd.f32 %v351, %v446
    %v448 = vpop.f32.mrb[0].mxu0
    %v449 = vpop.f32.mrb[0].mxu0
    %v450 = vadd.f32 %v356, %v449
    %v451 = vpop.f32.mrb[0].mxu0
    %452 = vmatprep.mubr.bf16.mxu0 0
    %453 = vmatmul.mubr.bf16.gmra.mrb[0].mxu0 %v405
    %v454 = vpop.f32.mrb[0].mxu0
    %v455 = vadd.f32 %v361, %v454
    %v456 = vpop.f32.mrb[0].mxu0
    %v457 = vpop.f32.mrb[0].mxu0
    %v458 = vadd.f32 %v366, %v457
    %v459 = vpop.f32.mrb[0].mxu0
    %460 = vmatprep.mubr.bf16.mxu0 0
    %461 = vmatmul.mubr.bf16.gmra.mrb[0].mxu0 %v406
    %v462 = vpop.f32.mrb[0].mxu0
    %v463 = vadd.f32 %v371, %v462
    %v464 = vpop.f32.mrb[0].mxu0
    %v465 = vpop.f32.mrb[0].mxu0
    %v466 = vadd.f32 %v376, %v465
    %v467 = vpop.f32.mrb[0].mxu0
    %468 = vmatprep.mubr.bf16.mxu0 0
    %469 = vmatmul.mubr.bf16.gmra.mrb[0].mxu0 %v407
    %v470 = vpop.f32.mrb[0].mxu0
    %v471 = vadd.f32 %v381, %v470
    %v472 = vpop.f32.mrb[0].mxu0
    %v473 = vpop.f32.mrb[0].mxu0
    %v474 = vadd.f32 %v386, %v473
    %v475 = vpop.f32.mrb[0].mxu0
    %476 = vdwg.mxu0
    %v477 = vmax.f32 %v447, 0.0
    %v478 = vmax.f32 %v450, 0.0
    %v479 = vmax.f32 %v455, 0.0
    %v480 = vmax.f32 %v458, 0.0
    %v481 = vmax.f32 %v463, 0.0
    %v482 = vmax.f32 %v466, 0.0
    %v483 = vmax.f32 %v471, 0.0
    %v484 = vmax.f32 %v474, 0.0
    %v485 = vld [vmem:[%s5] sm:$0x1]
    %v486 = vpack.c.bf16 %v478, %v477
    %v487 = vpack.c.bf16 %v480, %v479
    %v488 = vpack.c.bf16 %v482, %v481
    %v489 = vpack.c.bf16 %v484, %v483
    %v490 = vld [vmem:[%s6] sm:$0x3]
    %492 = vset.pattern.permute.xlu0 0
    %493 = vperm.xlu0 %492, %v490
    %v494 = vpop.permute.xlu0 %493
    %vm496 = vcmask 523264
    %v498 = vsel %vm496, %v485, 0
    %500 = vmatprep.subr.bf16.mxu0 0
    %501 = vmatpush1.bf16.msra.mxu0 %v486
    %502 = vmatprep.subr.bf16.mxu0 0
    %503 = vmatpush1.bf16.msra.mxu0 %v487
    %504 = vmatprep.subr.bf16.mxu0 0
    %505 = vmatpush1.bf16.msra.mxu0 %v488
    %506 = vmatprep.subr.bf16.mxu0 0
    %507 = vmatpush1.bf16.msra.mxu0 %v489
    %508 = vmatprep.subr.bf16.mxu0 0
    %509 = vmatpush1.bf16.msra.mxu0 0
    %510 = vmatprep.subr.bf16.mxu0 0
    %511 = vmatpush1.bf16.msra.mxu0 0
    %512 = vmatprep.subr.bf16.mxu0 0
    %513 = vmatpush1.bf16.msra.mxu0 0
    %514 = vmatprep.subr.bf16.mxu0 0
    %515 = vmatpush1.bf16.msra.mxu0 0
    %516 = vmatprep.subr.bf16.mxu0 0
    %517 = vmatpush1.bf16.msra.mxu0 0
    %518 = vmatprep.subr.bf16.mxu0 0
    %519 = vmatpush1.bf16.msra.mxu0 0
    %520 = vmatprep.subr.bf16.mxu0 0
    %521 = vmatpush1.bf16.msra.mxu0 0
    %522 = vmatprep.subr.bf16.mxu0 0
    %523 = vmatpush1.bf16.msra.mxu0 0
    %524 = vmatprep.subr.bf16.mxu0 0
    %525 = vmatpush1.bf16.msra.mxu0 0
    %526 = vmatprep.subr.bf16.mxu0 0
    %527 = vmatpush1.bf16.msra.mxu0 0
    %528 = vmatprep.subr.bf16.mxu0 0
    %529 = vmatpush1.bf16.msra.mxu0 0
    %530 = vmatprep.subr.bf16.mxu0 0
    %531 = vmatpush1.bf16.msra.mxu0 0
    %532 = vmatprep.mubr.bf16.mxu0 0
    %533 = vmatmul.mubr.bf16.gmra.mrb[0].mxu0 %v498
    %v534 = vpop.f32.mrb[0].mxu0
    %v535 = vadd.f32 %v494, %v534
    %v536 = vpop.f32.mrb[0].mxu0
    %v537 = vpop.f32.mrb[0].mxu0
    %v538 = vpop.f32.mrb[0].mxu0
    %539 = vdwg.mxu0
    %540 = vst [vmem:[#allocation2] sm:$0x3] %v535
    // Predicated region
    $region30: #{tpu_custom_call.1} parent=1 // pred_check
      _
    $region31: #{tpu_custom_call.1} parent=1 // pred_check_branch
      %542 = sbr.rel (0) target = $region33
    $region32: #{tpu_custom_call.1} parent=1 // pred_region
      %s544 = ssub.s32 32, 32
      %545 = vsyncadd [#allocation3], %s544
      %s547 = sshll.u32 [#allocation2], 4
      %s548 = int_to_ptr.vmem [resolvable:$true] %s547
      %550 = dma.vmem_to_hbm [thread:$0]  %s548, 32, %s7, [#allocation3]
    $region33: #{tpu_custom_call.1} parent=1 // pred_fallthru
      _
    // Predicated region
    $region34: #{tpu_custom_call.1} parent=1 // pred_check
      _
    $region35: #{tpu_custom_call.1} parent=1 // pred_check_branch
      %552 = sbr.rel (0) target = $region37
    $region36: #{tpu_custom_call.1} parent=1 // pred_region
      %553 = dma.done [#allocation3], 32
    $region37: #{tpu_custom_call.1} parent=1 // pred_fallthru
      _
    %554 = vsyncpa [#allocation3], 1

</llo_original>
